<compile_context>
chip_gen: v7x
topology: tpu7x:2x2x1
jax: 0.10.0
libtpu: 0.0.40
codegen_flags: <defaults>
</compile_context>

<pallas_src>
import jax
import jax.numpy as jnp
from jax.experimental import pallas as pl
from jax.experimental.pallas import tpu as pltpu


def _round_up(x, m):
    return ((x + m - 1) // m) * m


# --------------------------------------------------------------------------------------------
# Pallas kernel: one (tu, tt) tile of the (U, T) grid for one batch element.
#   hp_ref : (1, tu, Hp)   pre-projected prediction states (bias already added)
#   ht_ref : (1, tt, Hp)   pre-projected transcript states
#   w2_ref : (Hp, Lp)      second joint layer weight (zero-padded)
#   b2_ref : (1, Lp)       second joint layer bias  (zero-padded, f32)
#   out_ref: (1, tu, tt, Lp)
# --------------------------------------------------------------------------------------------
def joint_kernel(hp_ref, ht_ref, w2_ref, b2_ref, out_ref):
    hp = hp_ref[0]                                     # (tu, Hp)
    ht = ht_ref[0]                                     # (tt, Hp)

    # Broadcast-add over the (U, T) tile, then tanh (VPU + EUP).
    hidden = jnp.tanh(hp[:, None, :] + ht[None, :, :])  # (tu, tt, Hp)
    tu, tt, Hp = hidden.shape

    # Second joint linear layer on the MXU; tu*tt rows, Hp/Lp lane-aligned to 128.
    # The reshape is (8,128)-aligned (tu, tt multiples of 8; Hp multiple of 128) -> free view.
    logits = jnp.dot(hidden.reshape(tu * tt, Hp), w2_ref[...],
                     preferred_element_type=jnp.float32) + b2_ref[...]   # (tu*tt, Lp) f32
    out_ref[0] = logits.reshape(tu, tt, -1)


def transducer_joint(transcript, predict, w1, b1, w2, b2,
                     *, tile_u=128, tile_t=128, compute_dtype=jnp.float32):
    """Joint network Linear(Dp+Dt, H) -> Tanh -> Linear(H, L) over the (U, T) grid.

    compute_dtype=jnp.bfloat16 is recommended on v6e/v7x (halves the hidden tile footprint and
    runs the MXU at bf16 peak); keep f32 on v5e (no bf16 VPU/EUP).
    """
    B, T, Dt = transcript.shape
    _, U, Dp = predict.shape
    H = w1.shape[1]
    L = w2.shape[1]

    # ---- pad feature dims to lane width (128) and grid dims to tile multiples ----------------
    Hp = _round_up(H, 128)
    Lp = _round_up(L, 128)
    tu = min(tile_u, _round_up(U, 8))
    tt = min(tile_t, _round_up(T, 8))
    Up = _round_up(U, tu)
    Tp = _round_up(T, tt)

    # concat order in the reference is (predict, transcript) -> split W1 accordingly.
    w1_p = jnp.pad(w1[:Dp], ((0, 0), (0, Hp - H)))          # (Dp, Hp)
    w1_t = jnp.pad(w1[Dp:], ((0, 0), (0, Hp - H)))          # (Dt, Hp)
    b1_pad = jnp.pad(b1, (0, Hp - H))                       # (Hp,)
    w2_pad = jnp.pad(w2, ((0, Hp - H), (0, Lp - L)))        # (Hp, Lp)  zero rows for padded H
    b2_pad = jnp.pad(b2, (0, Lp - L)).reshape(1, Lp)        # (1, Lp)

    # ---- hoisted first-layer projections (once per batch, NOT once per (u,t) tile) -----------
    hi = jax.lax.Precision.HIGHEST
    h_t = jnp.einsum("btd,dh->bth", transcript, w1_t, precision=hi)            # (B, T, Hp)
    h_p = jnp.einsum("bud,dh->buh", predict, w1_p, precision=hi) + b1_pad      # (B, U, Hp)
    h_t = jnp.pad(h_t, ((0, 0), (0, Tp - T), (0, 0)))                          # (B, Tp, Hp)
    h_p = jnp.pad(h_p, ((0, 0), (0, Up - U), (0, 0)))                          # (B, Up, Hp)

    h_t = h_t.astype(compute_dtype)
    h_p = h_p.astype(compute_dtype)
    w2_k = w2_pad.astype(compute_dtype)

    out_padded = pl.pallas_call(
        joint_kernel,
        out_shape=jax.ShapeDtypeStruct((B, Up, Tp, Lp), jnp.float32),
        grid_spec=pltpu.PrefetchScalarGridSpec(
            num_scalar_prefetch=0,
            grid=(B, Up // tu, Tp // tt),
            in_specs=[
                pl.BlockSpec((1, tu, Hp), lambda b, u, t: (b, u, 0)),
                pl.BlockSpec((1, tt, Hp), lambda b, u, t: (b, t, 0)),
                pl.BlockSpec((Hp, Lp), lambda b, u, t: (0, 0)),
                pl.BlockSpec((1, Lp), lambda b, u, t: (0, 0)),
            ],
            out_specs=pl.BlockSpec((1, tu, tt, Lp), lambda b, u, t: (b, u, t, 0)),
        ),
        compiler_params=pltpu.CompilerParams(
            dimension_semantics=("parallel", "parallel", "parallel"),
            vmem_limit_bytes=48 * 1024 * 1024,
        ),
    )(h_p, h_t, w2_k, b2_pad)

    # Slice the zero-padding back off -> reference layout (B, U, T, L).
    return out_padded[:, :U, :T, :L]


# ----- stand-in encoders (plain-JAX glue) ---------------------------------------------------
def transcriptor_apply(feature, feat_len, w, b):
    # feature: (B, T, F) -> (B, T, Dt).  feat_len unused in this dense stand-in.
    del feat_len
    return jnp.tanh(feature @ w + b)


def predictor_apply(padded_label, label_len, emb):
    # padded_label: (B, U) int32 -> (B, U, Dp).  label_len unused in this stand-in.
    del label_len
    return emb[padded_label]


def transducer_forward(feature, feat_len, label, label_len, params,
                       compute_dtype=jnp.float32):
    transcript = transcriptor_apply(feature, feat_len, params["wt"], params["bt"])
    pad_label = jnp.pad(label, ((0, 0), (1, 0)), constant_values=0)  # F.pad(label, (1,0), value=0)
    predict = predictor_apply(pad_label, label_len + 1, params["emb"])
    return transducer_joint(transcript, predict,
                            params["w1"], params["b1"], params["w2"], params["b2"],
                            compute_dtype=compute_dtype)


if __name__ == "__main__":
    B, T, F = 2, 16, 16         # batch, time steps, acoustic feature dim
    U_lab = 8                   # label length (U = U_lab + 1 after blank pad)
    Dt = Dp = 32                # encoder output dims
    H = 32                      # joint hidden size
    L = 16                      # label (vocab) size

    key = jax.random.PRNGKey(0)
    k = jax.random.split(key, 8)

    feature = jax.random.normal(k[0], (B, T, F), jnp.float32)
    feat_len = jnp.full((B,), T, jnp.int32)
    label = jax.random.randint(k[1], (B, U_lab), 1, L, dtype=jnp.int32)
    label_len = jnp.full((B,), U_lab, jnp.int32)

    params = {
        "wt": 0.1 * jax.random.normal(k[2], (F, Dt), jnp.float32),
        "bt": jnp.zeros((Dt,), jnp.float32),
        "emb": 0.1 * jax.random.normal(k[3], (L, Dp), jnp.float32),
        "w1": 0.1 * jax.random.normal(k[4], (Dp + Dt, H), jnp.float32),
        "b1": 0.01 * jax.random.normal(k[5], (H,), jnp.float32),
        "w2": 0.1 * jax.random.normal(k[6], (H, L), jnp.float32),
        "b2": 0.01 * jax.random.normal(k[7], (L,), jnp.float32),
    }

    out = transducer_forward(feature, feat_len, label, label_len, params)
    out = jax.block_until_ready(out)

    # pure-JAX reference for the joint network (un-folded concat formulation)
    transcript = transcriptor_apply(feature, feat_len, params["wt"], params["bt"])
    pad_label = jnp.pad(label, ((0, 0), (1, 0)), constant_values=0)
    predict = predictor_apply(pad_label, label_len + 1, params["emb"])
    U = U_lab + 1
    concat = jnp.concatenate(
        [jnp.broadcast_to(predict[:, :, None, :], (B, U, T, Dp)),
         jnp.broadcast_to(transcript[:, None, :, :], (B, U, T, Dt))], axis=-1)
    hi = jax.lax.Precision.HIGHEST
    hidden_ref = jnp.tanh(
        jnp.einsum("butd,dh->buth", concat, params["w1"], precision=hi) + params["b1"])
    ref = jnp.einsum("buth,hl->butl", hidden_ref, params["w2"], precision=hi) + params["b2"]

    assert out.shape == (B, U, T, L)
    assert jnp.allclose(out, ref, atol=1e-4, rtol=1e-4), float(jnp.max(jnp.abs(out - ref)))
    print("KERNEL_OK")
</pallas_src>

<mosaic_0001>
module attributes {stable_mosaic.version = 11 : i64} {
  func.func @joint_kernel(%arg0: i32, %arg1: i32, %arg2: i32, %arg3: memref<1x16x128xf32, #tpu.memory_space<vmem>>, %arg4: memref<1x16x128xf32, #tpu.memory_space<vmem>>, %arg5: memref<128x128xf32, #tpu.memory_space<vmem>>, %arg6: memref<1x128xf32, #tpu.memory_space<vmem>>, %arg7: memref<1x16x16x128xf32, #tpu.memory_space<vmem>>) attributes {dimension_semantics = [#tpu.dimension_semantics<parallel>, #tpu.dimension_semantics<parallel>, #tpu.dimension_semantics<parallel>], iteration_bounds = array<i64: 2, 1, 1>, scalar_prefetch = 0 : i64, scratch_operands = 0 : i64, tpu.core_type = #tpu.core_type<tc>, window_params = [{transform_indices = @transform_0, window_bounds = array<i64: 1, 16, 128>}, {transform_indices = @transform_1, window_bounds = array<i64: 1, 16, 128>}, {pipeline_mode = #tpu.pipeline_mode<synchronous>, transform_indices = @transform_2, window_bounds = array<i64: 128, 128>}, {pipeline_mode = #tpu.pipeline_mode<synchronous>, transform_indices = @transform_3, window_bounds = array<i64: 1, 128>}, {transform_indices = @transform_4, window_bounds = array<i64: 1, 16, 16, 128>}]} {
    %c0 = arith.constant 0 : index
    %c0_0 = arith.constant 0 : index
    %c0_1 = arith.constant 0 : index
    %0 = vector.load %arg3[%c0, %c0_0, %c0_1] : memref<1x16x128xf32, #tpu.memory_space<vmem>>, vector<1x16x128xf32>
    %1 = vector.shape_cast %0 : vector<1x16x128xf32> to vector<16x128xf32>
    %c0_2 = arith.constant 0 : index
    %c0_3 = arith.constant 0 : index
    %c0_4 = arith.constant 0 : index
    %2 = vector.load %arg4[%c0_2, %c0_3, %c0_4] : memref<1x16x128xf32, #tpu.memory_space<vmem>>, vector<1x16x128xf32>
    %3 = vector.shape_cast %2 : vector<1x16x128xf32> to vector<16x128xf32>
    %4 = vector.shape_cast %1 : vector<16x128xf32> to vector<16x1x128xf32>
    %5 = vector.shape_cast %3 : vector<16x128xf32> to vector<1x16x128xf32>
    %6 = vector.broadcast %4 : vector<16x1x128xf32> to vector<16x16x128xf32>
    %7 = vector.broadcast %5 : vector<1x16x128xf32> to vector<16x16x128xf32>
    %8 = arith.addf %6, %7 : vector<16x16x128xf32>
    %9 = math.tanh %8 : vector<16x16x128xf32>
    %10 = vector.shape_cast %9 : vector<16x16x128xf32> to vector<256x128xf32>
    %c0_5 = arith.constant 0 : index
    %c0_6 = arith.constant 0 : index
    %11 = vector.load %arg5[%c0_5, %c0_6] : memref<128x128xf32, #tpu.memory_space<vmem>>, vector<128x128xf32>
    %cst = arith.constant dense<0.000000e+00> : vector<256x128xf32>
    %12 = tpu.matmul %10, %11, %cst {dimension_numbers = #tpu.dot_dimension_numbers<[1], [0], [0], [1], [0, 0, 1, 1], [], []>} : vector<256x128xf32>, vector<128x128xf32>, vector<256x128xf32> -> vector<256x128xf32>
    %c0_7 = arith.constant 0 : index
    %c0_8 = arith.constant 0 : index
    %13 = vector.load %arg6[%c0_7, %c0_8] : memref<1x128xf32, #tpu.memory_space<vmem>>, vector<1x128xf32>
    %14 = vector.broadcast %13 : vector<1x128xf32> to vector<256x128xf32>
    %15 = arith.addf %12, %14 : vector<256x128xf32>
    %16 = vector.shape_cast %15 : vector<256x128xf32> to vector<16x16x128xf32>
    %c0_9 = arith.constant 0 : index
    %c0_10 = arith.constant 0 : index
    %c0_11 = arith.constant 0 : index
    %c0_12 = arith.constant 0 : index
    %17 = vector.load %arg7[%c0_9, %c0_10, %c0_11, %c0_12] : memref<1x16x16x128xf32, #tpu.memory_space<vmem>>, vector<1x16x16x128xf32>
    %18 = vector.shape_cast %17 : vector<1x16x16x128xf32> to vector<16x16x128xf32>
    %19 = vector.shape_cast %16 : vector<16x16x128xf32> to vector<1x16x16x128xf32>
    tpu.vector_store %arg7[%c0_9, %c0_10, %c0_11, %c0_12], %19 {strides = array<i32>} : memref<1x16x16x128xf32, #tpu.memory_space<vmem>>, vector<1x16x16x128xf32>,
    return
  }
  func.func @transform_0(%arg0: i32, %arg1: i32, %arg2: i32) -> (i32, i32, i32) {
    %c0_i32 = arith.constant 0 : i32
    %c0_i32_0 = arith.constant 0 : i32
    return %arg0, %arg1, %c0_i32 : i32, i32, i32
  }
  func.func @transform_1(%arg0: i32, %arg1: i32, %arg2: i32) -> (i32, i32, i32) {
    %c0_i32 = arith.constant 0 : i32
    %c0_i32_0 = arith.constant 0 : i32
    return %arg0, %arg2, %c0_i32 : i32, i32, i32
  }
  func.func @transform_2(%arg0: i32, %arg1: i32, %arg2: i32) -> (i32, i32) {
    %c0_i32 = arith.constant 0 : i32
    %c0_i32_0 = arith.constant 0 : i32
    %c0_i32_1 = arith.constant 0 : i32
    return %c0_i32, %c0_i32_0 : i32, i32
  }
  func.func @transform_3(%arg0: i32, %arg1: i32, %arg2: i32) -> (i32, i32) {
    %c0_i32 = arith.constant 0 : i32
    %c0_i32_0 = arith.constant 0 : i32
    %c0_i32_1 = arith.constant 0 : i32
    return %c0_i32, %c0_i32_0 : i32, i32
  }
  func.func @transform_4(%arg0: i32, %arg1: i32, %arg2: i32) -> (i32, i32, i32, i32) {
    %c0_i32 = arith.constant 0 : i32
    %c0_i32_0 = arith.constant 0 : i32
    return %arg0, %arg1, %arg2, %c0_i32 : i32, i32, i32, i32
  }
}

</mosaic_0001>

<llo_original>
// kernel: tpu_custom_call.1
$region0: #{tpu_custom_call.1}
  #allocation0 [shape = 'u32[]', space=smem, size = 0x4, offset = 0x4, fixed_abs, tag = 'smem constant byte address 0x4 - core index']
  #allocation1 [shape = 'u32[144,128]{1,0:T(1,128)}', space=vmem, size = 0x12000, scoped, tag = 'internal scratch']
  %s0 = inlined_call_operand.hbm [shape: f32[2,16,128], index: 0, kind: input, shape index: {}]
  %s1 = inlined_call_operand.hbm [shape: f32[2,16,128], index: 1, kind: input, shape index: {}]
  %s2 = inlined_call_operand.hbm [shape: f32[128,128], index: 2, kind: input, shape index: {}]
  %s3 = inlined_call_operand.vmem [shape: f32[1,128], index: 3, kind: input, shape index: {}]
  %s4 = inlined_call_operand.hbm [shape: f32[2,16,16,128], index: 4, kind: output, shape index: {}]
  %s5 = sld [smem:[#allocation0]]
  $region61: #{tpu_custom_call.1} parent=0
    _
  %s7 = ssub.s32 1, %s5
  %s8 = scalar_select 0, %s7, %s5
  $region1: #{tpu_custom_call.1} parent=0
    #allocation2 [shape = 'u8[16384]{0}', space=vmem, size = 0x4000, scoped, tag = 'input window, operand 0']
    #allocation3 [shape = 's32[2]{0}', space=sflag, size = 0x8, scoped, tag = 'scoped memory for tpu_custom_call.1']
    #allocation4 [shape = 's32[2]{0}', space=sflag, size = 0x8, scoped, tag = 'scoped memory for tpu_custom_call.1']
    #allocation5 [shape = 'u8[16384]{0}', space=vmem, size = 0x4000, scoped, tag = 'input window, operand 1']
    #allocation6 [shape = 's32[2]{0}', space=sflag, size = 0x8, scoped, tag = 'scoped memory for tpu_custom_call.1']
    #allocation7 [shape = 'u8[65536]{0}', space=vmem, size = 0x10000, scoped, tag = 'input window, operand 2, single buffered']
    #allocation8 [shape = 'u8[262144]{0}', space=vmem, size = 0x40000, scoped, tag = 'output window, operand 0']
    %9 = vsyncpa [#allocation3], 0
    %s10 = scalar_lea.sflag [#allocation3], 1
    %11 = vsyncpa %s10, 0
    %12 = vsyncpa [#allocation6], 0
    %s13 = scalar_lea.sflag [#allocation6], 1
    %14 = vsyncpa %s13, 0
    %15 = vsyncpa [#allocation4], 0
    %s16 = scalar_lea.sflag [#allocation4], 1
    %17 = vsyncpa %s16, 0
    loop: start=0, step=1, limit=4
    $region2: #{tpu_custom_call.1} parent=1 // loop_pre_header
      _
    $region3: #{tpu_custom_call.1} parent=1 // loop_header
      %s19 = sphi 0, %s23
      %p20 = scmp.ge.s32.totalorder %s19, 4
      %s26 = sphi 0, %s45
      %s27 = sphi 0, %s41
      %s28 = sphi 0, %s37
      %s29 = sphi 0, %s26
      %s30 = sphi 0, %s27
      %s31 = sphi 0, %s28
      %s32 = sphi 0, %s29
      %s33 = sphi 0, %s30
      %s34 = sphi 0, %s31
      %s50 = sphi 0, %s52
      %s53 = sphi 0, %s50
      %s54 = sphi 0, %s53
      %s70 = sphi 0, %s54
      %s78 = sphi 0, %s80
      %s81 = sphi 0, %s78
      %s82 = sphi 0, %s81
      %s98 = sphi 0, %s82
      %s102 = sphi 0, %s102
      %s104 = sphi 0, %s102
      %s105 = sphi 0, %s104
      %s119 = sphi 0, %s105
      %s123 = sphi 0, %s123
      %s125 = sphi 0, %s123
      %s126 = sphi 0, %s125
      %s140 = sphi 0, %s126
      %s150 = sphi 0, %s152
      %s153 = sphi 0, %s150
      %s154 = sphi 0, %s153
      %s170 = sphi 0, %s154
    $region4: #{tpu_custom_call.1} parent=1 // loop_header_branch
      %22 = sbr.rel (%p20) target = $region8
    $region5: #{tpu_custom_call.1} parent=1 // loop_body
      %s24 = ssub.s32 %s19, 1
      %s25 = ssub.s32 %s19, 2
      %s35 = sadd.s32 1, %s28
      %p36 = scmp.ge.s32.totalorder %s35, 1
      %s37 = scalar_select %p36, 0, %s35
      %s38 = sadd.s32 1, %s27
      %s39 = scalar_select %p36, %s38, %s27
      %p40 = scmp.ge.s32.totalorder %s39, 1
      %s41 = scalar_select %p40, 0, %s39
      %s42 = sadd.s32 1, %s26
      %s43 = scalar_select %p40, %s42, %s26
      %p44 = scmp.ge.s32.totalorder %s43, 2
      %s45 = scalar_select %p44, 0, %s43
      %s46 = ssub.s32 %s26, %s45
      %s47 = ssub.s32 %s27, %s41
      %s48 = sor.u32 %s46, %s47
      %p49 = scmp.eq.s32.totalorder %s48, 0
      %s51 = sadd.s32 %s50, 1
      %s52 = scalar_select %p49, %s50, %s51
      %p55 = pneg %p49
      %p56 = scmp.eq.s32.totalorder %s19, 1
      %p57 = por %p55, %p56
      %p58 = scmp.ne.s32.totalorder %s50, %s53
      %p59 = scmp.eq.s32.totalorder %s19, 0
      %p60 = por %p58, %p59
      %p61 = scmp.ne.s32.totalorder %s50, %s53
      %p62 = scmp.eq.s32.totalorder %s24, 1
      %p63 = por %p61, %p62
      %p64 = scmp.ne.s32.totalorder %s53, %s54
      %p65 = scmp.eq.s32.totalorder %s24, 0
      %p66 = por %p64, %p65
      %p67 = scmp.ne.s32.totalorder %s53, %s54
      %p68 = scmp.eq.s32.totalorder %s25, 1
      %p69 = por %p67, %p68
      %p71 = scmp.ne.s32.totalorder %s54, %s70
      %p72 = scmp.eq.s32.totalorder %s25, 0
      %p73 = por %p71, %p72
      %s74 = ssub.s32 %s26, %s45
      %s75 = ssub.s32 %s28, %s37
      %s76 = sor.u32 %s74, %s75
      %p77 = scmp.eq.s32.totalorder %s76, 0
      %s79 = sadd.s32 %s78, 1
      %s80 = scalar_select %p77, %s78, %s79
      %p83 = pneg %p77
      %p84 = scmp.eq.s32.totalorder %s19, 1
      %p85 = por %p83, %p84
      %p86 = scmp.ne.s32.totalorder %s78, %s81
      %p87 = scmp.eq.s32.totalorder %s19, 0
      %p88 = por %p86, %p87
      %p89 = scmp.ne.s32.totalorder %s78, %s81
      %p90 = scmp.eq.s32.totalorder %s24, 1
      %p91 = por %p89, %p90
      %p92 = scmp.ne.s32.totalorder %s81, %s82
      %p93 = scmp.eq.s32.totalorder %s24, 0
      %p94 = por %p92, %p93
      %p95 = scmp.ne.s32.totalorder %s81, %s82
      %p96 = scmp.eq.s32.totalorder %s25, 1
      %p97 = por %p95, %p96
      %p99 = scmp.ne.s32.totalorder %s82, %s98
      %p100 = scmp.eq.s32.totalorder %s25, 0
      %p101 = por %p99, %p100
      %s103 = sadd.s32 %s102, 1
      %p106 = scmp.eq.s32.totalorder %s19, 1
      %p107 = scmp.ne.s32.totalorder %s102, %s104
      %p108 = scmp.eq.s32.totalorder %s19, 0
      %p109 = por %p107, %p108
      %p110 = scmp.ne.s32.totalorder %s102, %s104
      %p111 = scmp.eq.s32.totalorder %s24, 1
      %p112 = por %p110, %p111
      %p113 = scmp.ne.s32.totalorder %s104, %s105
      %p114 = scmp.eq.s32.totalorder %s24, 0
      %p115 = por %p113, %p114
      %p116 = scmp.ne.s32.totalorder %s104, %s105
      %p117 = scmp.eq.s32.totalorder %s25, 1
      %p118 = por %p116, %p117
      %p120 = scmp.ne.s32.totalorder %s105, %s119
      %p121 = scmp.eq.s32.totalorder %s25, 0
      %p122 = por %p120, %p121
      %s124 = sadd.s32 %s123, 1
      %p127 = scmp.eq.s32.totalorder %s19, 1
      %p128 = scmp.ne.s32.totalorder %s123, %s125
      %p129 = scmp.eq.s32.totalorder %s19, 0
      %p130 = por %p128, %p129
      %p131 = scmp.ne.s32.totalorder %s123, %s125
      %p132 = scmp.eq.s32.totalorder %s24, 1
      %p133 = por %p131, %p132
      %p134 = scmp.ne.s32.totalorder %s125, %s126
      %p135 = scmp.eq.s32.totalorder %s24, 0
      %p136 = por %p134, %p135
      %p137 = scmp.ne.s32.totalorder %s125, %s126
      %p138 = scmp.eq.s32.totalorder %s25, 1
      %p139 = por %p137, %p138
      %p141 = scmp.ne.s32.totalorder %s126, %s140
      %p142 = scmp.eq.s32.totalorder %s25, 0
      %p143 = por %p141, %p142
      %s144 = ssub.s32 %s26, %s45
      %s145 = ssub.s32 %s27, %s41
      %s146 = sor.u32 %s144, %s145
      %s147 = ssub.s32 %s28, %s37
      %s148 = sor.u32 %s146, %s147
      %p149 = scmp.eq.s32.totalorder %s148, 0
      %s151 = sadd.s32 %s150, 1
      %s152 = scalar_select %p149, %s150, %s151
      %p155 = pneg %p149
      %p156 = scmp.eq.s32.totalorder %s19, 1
      %p157 = por %p155, %p156
      %p158 = scmp.ne.s32.totalorder %s150, %s153
      %p159 = scmp.eq.s32.totalorder %s19, 0
      %p160 = por %p158, %p159
      %p161 = scmp.ne.s32.totalorder %s150, %s153
      %p162 = scmp.eq.s32.totalorder %s24, 1
      %p163 = por %p161, %p162
      %p164 = scmp.ne.s32.totalorder %s153, %s154
      %p165 = scmp.eq.s32.totalorder %s24, 0
      %p166 = por %p164, %p165
      %p167 = scmp.ne.s32.totalorder %s153, %s154
      %p168 = scmp.eq.s32.totalorder %s25, 1
      %p169 = por %p167, %p168
      %p171 = scmp.ne.s32.totalorder %s154, %s170
      %p172 = scmp.eq.s32.totalorder %s25, 0
      %p173 = por %p171, %p172
      %p174 = scmp.le.s32.totalorder 1, %s19
      %p175 = scmp.lt.s32.totalorder %s19, 3
      %p176 = pnand %p174, %p175
      %p177 = pneg %p176
      // Predicated region
      $region9: #{tpu_custom_call.1} parent=5 // pred_check
        _
      $region10: #{tpu_custom_call.1} parent=5 // pred_check_branch
        %179 = sbr.rel (%p176) target = $region12
      $region11: #{tpu_custom_call.1} parent=5 // pred_region
        %s180 = ssub.s32 %s19, 1
        // Predicated region
        $region13: #{tpu_custom_call.1} parent=11 // pred_check
          %p181 = pneg %p115
        $region14: #{tpu_custom_call.1} parent=11 // pred_check_branch
          %183 = sbr.rel (%p181) target = $region16
        $region15: #{tpu_custom_call.1} parent=11 // pred_region
          %s185 = ssub.s32 2048, 2048
          %186 = vsyncadd [#allocation6], %s185
          %s187 = sshll.u32 [#allocation7], 4
          %s188 = int_to_ptr.vmem [resolvable:$true] %s187
          %193 = dma.hbm_to_vmem [thread:$0]  %s2, 2048, %s188, [#allocation6], 128, 128, 8
        $region16: #{tpu_custom_call.1} parent=11 // pred_fallthru
          _
        // Predicated region
        $region17: #{tpu_custom_call.1} parent=11 // pred_check
          %p194 = pneg %p136
        $region18: #{tpu_custom_call.1} parent=11 // pred_check_branch
          %196 = sbr.rel (%p194) target = $region20
        $region19: #{tpu_custom_call.1} parent=11 // pred_region
          _
        $region20: #{tpu_custom_call.1} parent=11 // pred_fallthru
          _
      $region12: #{tpu_custom_call.1} parent=5 // pred_fallthru
        _
      %p197 = scmp.lt.s32.totalorder %s19, 2
      // Predicated region
      $region21: #{tpu_custom_call.1} parent=5 // pred_check
        %p198 = pneg %p197
      $region22: #{tpu_custom_call.1} parent=5 // pred_check_branch
        %200 = sbr.rel (%p198) target = $region24
      $region23: #{tpu_custom_call.1} parent=5 // pred_region
        // Predicated region
        $region25: #{tpu_custom_call.1} parent=23 // pred_check
          %p201 = pneg %p60
        $region26: #{tpu_custom_call.1} parent=23 // pred_check_branch
          %203 = sbr.rel (%p201) target = $region28
        $region27: #{tpu_custom_call.1} parent=23 // pred_region
          %s204 = sand.u32 %s50, 1
          %s205 = scalar_lea.sflag [#allocation3], %s204
          %s206 = sand.u32 %s50, 1
          %s207 = smul.addr %s206, 16
          %s208 = scalar_lea.vmem [#allocation2], %s207
          %s209 = smul.u32 2, %s27
          %s211 = ssub.s32 256, 256
          %212 = vsyncadd %s205, %s211
          %s213 = smul.addr %s26, 2
          %s214 = sadd.s32 %s209, %s213
          %s215 = smul.addr %s214, 128
          %s216 = scalar_lea.hbm %s0, %s215
          %s217 = sshll.u32 %s208, 4
          %s218 = int_to_ptr.vmem [resolvable:$true] %s217
          %223 = dma.hbm_to_vmem [thread:$0]  %s216, 256, %s218, %s205, 128, 128, 8
        $region28: #{tpu_custom_call.1} parent=23 // pred_fallthru
          _
        // Predicated region
        $region29: #{tpu_custom_call.1} parent=23 // pred_check
          %p224 = pneg %p88
        $region30: #{tpu_custom_call.1} parent=23 // pred_check_branch
          %226 = sbr.rel (%p224) target = $region32
        $region31: #{tpu_custom_call.1} parent=23 // pred_region
          %s227 = sand.u32 %s19, 1
          %s228 = scalar_lea.sflag [#allocation6], %s227
          %s229 = sand.u32 %s78, 1
          %s230 = smul.addr %s229, 16
          %s231 = scalar_lea.vmem [#allocation5], %s230
          %s232 = smul.u32 2, %s28
          %s234 = ssub.s32 256, 256
          %235 = vsyncadd %s228, %s234
          %s236 = smul.addr %s26, 2
          %s237 = sadd.s32 %s232, %s236
          %s238 = smul.addr %s237, 128
          %s239 = scalar_lea.hbm %s1, %s238
          %s240 = sshll.u32 %s231, 4
          %s241 = int_to_ptr.vmem [resolvable:$true] %s240
          %246 = dma.hbm_to_vmem [thread:$0]  %s239, 256, %s241, %s228, 128, 128, 8
        $region32: #{tpu_custom_call.1} parent=23 // pred_fallthru
          _
      $region24: #{tpu_custom_call.1} parent=5 // pred_fallthru
        _
      %p247 = scmp.le.s32.totalorder 1, %s19
      %p248 = scmp.lt.s32.totalorder %s19, 3
      %p249 = pnand %p247, %p248
      %p250 = pneg %p249
      // Predicated region
      $region33: #{tpu_custom_call.1} parent=5 // pred_check
        _
      $region34: #{tpu_custom_call.1} parent=5 // pred_check_branch
        %252 = sbr.rel (%p249) target = $region36
      $region35: #{tpu_custom_call.1} parent=5 // pred_region
        %s253 = ssub.s32 %s19, 1
        %s254 = sand.u32 %s53, 1
        %s255 = scalar_lea.sflag [#allocation3], %s254
        %s256 = sand.u32 %s53, 1
        %s257 = smul.addr %s256, 16
        %s258 = scalar_lea.vmem [#allocation2], %s257
        // Predicated region
        $region37: #{tpu_custom_call.1} parent=35 // pred_check
          %p259 = pneg %p66
        $region38: #{tpu_custom_call.1} parent=35 // pred_check_branch
          %261 = sbr.rel (%p259) target = $region40
        $region39: #{tpu_custom_call.1} parent=35 // pred_region
          %262 = dma.done %s255, 256
        $region40: #{tpu_custom_call.1} parent=35 // pred_fallthru
          _
        %s263 = sand.u32 %s24, 1
        %s264 = scalar_lea.sflag [#allocation6], %s263
        %s265 = sand.u32 %s81, 1
        %s266 = smul.addr %s265, 16
        %s267 = scalar_lea.vmem [#allocation5], %s266
        // Predicated region
        $region41: #{tpu_custom_call.1} parent=35 // pred_check
          %p268 = pneg %p94
        $region42: #{tpu_custom_call.1} parent=35 // pred_check_branch
          %270 = sbr.rel (%p268) target = $region44
        $region43: #{tpu_custom_call.1} parent=35 // pred_region
          %271 = dma.done %s264, 256
        $region44: #{tpu_custom_call.1} parent=35 // pred_fallthru
          _
        // Predicated region
        $region45: #{tpu_custom_call.1} parent=35 // pred_check
          %p272 = pneg %p115
        $region46: #{tpu_custom_call.1} parent=35 // pred_check_branch
          %274 = sbr.rel (%p272) target = $region48
        $region47: #{tpu_custom_call.1} parent=35 // pred_region
          %275 = dma.done [#allocation6], 2048
        $region48: #{tpu_custom_call.1} parent=35 // pred_fallthru
          _
        %s276 = sand.u32 %s53, 1
        %s277 = scalar_lea.sflag [#allocation3], %s276
        %s278 = sand.u32 %s53, 1
        %s279 = smul.addr %s278, 16
        %s280 = scalar_lea.vmem [#allocation2], %s279
        %p281 = pneg %p66
        %p282 = pneg %p63
        %s283 = sand.u32 %s24, 1
        %s284 = scalar_lea.sflag [#allocation6], %s283
        %s285 = sand.u32 %s81, 1
        %s286 = smul.addr %s285, 16
        %s287 = scalar_lea.vmem [#allocation5], %s286
        %p288 = pneg %p94
        %p289 = pneg %p91
        %p290 = pneg %p115
        %p291 = pneg %p112
        %p292 = pneg %p136
        %p293 = pneg %p133
        %p294 = pneg %p166
        %p295 = pneg %p163
        %s296 = sand.u32 %s153, 1
        %s297 = scalar_lea.sflag [#allocation4], %s296
        %s298 = sand.u32 %s153, 1
        %s299 = smul.addr %s298, 256
        %s300 = scalar_lea.vmem [#allocation8], %s299
        %s301 = smul.u32 2, %s30
        %s302 = smul.u32 2, %s31
        %s303 = smul.u32 16, %s30
        %s304 = smul.u32 2, %s31
        %v305 = vld [vmem:[%s258] sm:$0xff]
        %v306 = vld [vmem:[%s258 + $0x8] sm:$0xff]
        %v307 = vld [vmem:[%s267] sm:$0xff]
        %v308 = vld [vmem:[%s267 + $0x8] sm:$0xff]
        %v311 = vcombine.high %v305, %v305
        %v313 = vunpack.c.l.s4 1966171168
        %v314 = vunpack.c.0.s8 %v313
        %v315 = vlaneseq
        %v316 = vshrl.u32 %v315, 7
        %v317 = vsub.s32 %v314, %v316
        %v318 = vrot.slane %v305, %v317
        %v320 = vunpack.c.l.s4 1966171168
        %v321 = vunpack.c.0.s8 %v320
        %v322 = vlaneseq
        %v323 = vshrl.u32 %v322, 7
        %v324 = vsub.s32 %v321, %v323
        %v325 = vrot.slane %v311, %v324
        %v326 = vcombine.high %v318, %v318
        %v327 = vcombine.high %v325, %v325
        %v329 = vunpack.c.l.s4 1966171168
        %v330 = vunpack.c.0.s8 %v329
        %v331 = vlaneseq
        %v332 = vshrl.u32 %v331, 7
        %v333 = vsub.s32 %v330, %v332
        %v334 = vrot.slane %v318, %v333
        %v336 = vunpack.c.l.s4 1966171168
        %v337 = vunpack.c.0.s8 %v336
        %v338 = vlaneseq
        %v339 = vshrl.u32 %v338, 7
        %v340 = vsub.s32 %v337, %v339
        %v341 = vrot.slane %v325, %v340
        %v343 = vunpack.c.l.s4 1966171168
        %v344 = vunpack.c.0.s8 %v343
        %v345 = vlaneseq
        %v346 = vshrl.u32 %v345, 7
        %v347 = vsub.s32 %v344, %v346
        %v348 = vrot.slane %v326, %v347
        %v350 = vunpack.c.l.s4 1966171168
        %v351 = vunpack.c.0.s8 %v350
        %v352 = vlaneseq
        %v353 = vshrl.u32 %v352, 7
        %v354 = vsub.s32 %v351, %v353
        %v355 = vrot.slane %v327, %v354
        %v356 = vcombine.high %v334, %v334
        %v357 = vcombine.high %v341, %v341
        %v358 = vcombine.high %v348, %v348
        %v359 = vcombine.high %v355, %v355
        %v360 = vcombine.high %v306, %v306
        %v362 = vunpack.c.l.s4 1966171168
        %v363 = vunpack.c.0.s8 %v362
        %v364 = vlaneseq
        %v365 = vshrl.u32 %v364, 7
        %v366 = vsub.s32 %v363, %v365
        %v367 = vrot.slane %v306, %v366
        %v369 = vunpack.c.l.s4 1966171168
        %v370 = vunpack.c.0.s8 %v369
        %v371 = vlaneseq
        %v372 = vshrl.u32 %v371, 7
        %v373 = vsub.s32 %v370, %v372
        %v374 = vrot.slane %v360, %v373
        %v375 = vcombine.high %v367, %v367
        %v376 = vcombine.high %v374, %v374
        %v378 = vunpack.c.l.s4 1966171168
        %v379 = vunpack.c.0.s8 %v378
        %v380 = vlaneseq
        %v381 = vshrl.u32 %v380, 7
        %v382 = vsub.s32 %v379, %v381
        %v383 = vrot.slane %v367, %v382
        %v385 = vunpack.c.l.s4 1966171168
        %v386 = vunpack.c.0.s8 %v385
        %v387 = vlaneseq
        %v388 = vshrl.u32 %v387, 7
        %v389 = vsub.s32 %v386, %v388
        %v390 = vrot.slane %v374, %v389
        %v392 = vunpack.c.l.s4 1966171168
        %v393 = vunpack.c.0.s8 %v392
        %v394 = vlaneseq
        %v395 = vshrl.u32 %v394, 7
        %v396 = vsub.s32 %v393, %v395
        %v397 = vrot.slane %v375, %v396
        %v399 = vunpack.c.l.s4 1966171168
        %v400 = vunpack.c.0.s8 %v399
        %v401 = vlaneseq
        %v402 = vshrl.u32 %v401, 7
        %v403 = vsub.s32 %v400, %v402
        %v404 = vrot.slane %v376, %v403
        %v405 = vcombine.high %v383, %v383
        %v406 = vcombine.high %v390, %v390
        %v407 = vcombine.high %v397, %v397
        %v408 = vcombine.high %v404, %v404
        %v409 = vlaneseq
        %v410 = vshrl.u32 %v409, 7
        %v411 = vsub.s32 0, %v410
        %v412 = vrot.slane %v334, %v411
        %v413 = vlaneseq
        %v414 = vshrl.u32 %v413, 7
        %v415 = vsub.s32 0, %v414
        %v416 = vrot.slane %v348, %v415
        %v417 = vlaneseq
        %v418 = vshrl.u32 %v417, 7
        %v419 = vsub.s32 0, %v418
        %v420 = vrot.slane %v356, %v419
        %v421 = vlaneseq
        %v422 = vshrl.u32 %v421, 7
        %v423 = vsub.s32 0, %v422
        %v424 = vrot.slane %v358, %v423
        %v425 = vlaneseq
        %v426 = vshrl.u32 %v425, 7
        %v427 = vsub.s32 0, %v426
        %v428 = vrot.slane %v341, %v427
        %v429 = vlaneseq
        %v430 = vshrl.u32 %v429, 7
        %v431 = vsub.s32 0, %v430
        %v432 = vrot.slane %v355, %v431
        %v433 = vlaneseq
        %v434 = vshrl.u32 %v433, 7
        %v435 = vsub.s32 0, %v434
        %v436 = vrot.slane %v357, %v435
        %v437 = vlaneseq
        %v438 = vshrl.u32 %v437, 7
        %v439 = vsub.s32 0, %v438
        %v440 = vrot.slane %v359, %v439
        %v441 = vlaneseq
        %v442 = vshrl.u32 %v441, 7
        %v443 = vsub.s32 0, %v442
        %v444 = vrot.slane %v383, %v443
        %v445 = vlaneseq
        %v446 = vshrl.u32 %v445, 7
        %v447 = vsub.s32 0, %v446
        %v448 = vrot.slane %v397, %v447
        %v449 = vlaneseq
        %v450 = vshrl.u32 %v449, 7
        %v451 = vsub.s32 0, %v450
        %v452 = vrot.slane %v405, %v451
        %v453 = vlaneseq
        %v454 = vshrl.u32 %v453, 7
        %v455 = vsub.s32 0, %v454
        %v456 = vrot.slane %v407, %v455
        %v457 = vlaneseq
        %v458 = vshrl.u32 %v457, 7
        %v459 = vsub.s32 0, %v458
        %v460 = vrot.slane %v390, %v459
        %v461 = vlaneseq
        %v462 = vshrl.u32 %v461, 7
        %v463 = vsub.s32 0, %v462
        %v464 = vrot.slane %v404, %v463
        %v465 = vlaneseq
        %v466 = vshrl.u32 %v465, 7
        %v467 = vsub.s32 0, %v466
        %v468 = vrot.slane %v406, %v467
        %v469 = vlaneseq
        %v470 = vshrl.u32 %v469, 7
        %v471 = vsub.s32 0, %v470
        %v472 = vrot.slane %v408, %v471
        %v489 = vadd.f32 %v412, %v307
        %v490 = vadd.f32 %v412, %v308
        %v491 = vadd.f32 %v416, %v307
        %v492 = vadd.f32 %v416, %v308
        %v493 = vadd.f32 %v420, %v307
        %v494 = vadd.f32 %v420, %v308
        %v495 = vadd.f32 %v424, %v307
        %v496 = vadd.f32 %v424, %v308
        %v497 = vadd.f32 %v428, %v307
        %v498 = vadd.f32 %v428, %v308
        %v499 = vadd.f32 %v432, %v307
        %v500 = vadd.f32 %v432, %v308
        %v501 = vadd.f32 %v436, %v307
        %v502 = vadd.f32 %v436, %v308
        %v503 = vadd.f32 %v440, %v307
        %v504 = vadd.f32 %v440, %v308
        %v505 = vadd.f32 %v444, %v307
        %v506 = vadd.f32 %v444, %v308
        %v507 = vadd.f32 %v448, %v307
        %v508 = vadd.f32 %v448, %v308
        %v509 = vadd.f32 %v452, %v307
        %v510 = vadd.f32 %v452, %v308
        %v511 = vadd.f32 %v456, %v307
        %v512 = vadd.f32 %v456, %v308
        %v513 = vadd.f32 %v460, %v307
        %v514 = vadd.f32 %v460, %v308
        %v515 = vadd.f32 %v464, %v307
        %v516 = vadd.f32 %v464, %v308
        %v517 = vadd.f32 %v468, %v307
        %v518 = vadd.f32 %v468, %v308
        %v519 = vadd.f32 %v472, %v307
        %v520 = vadd.f32 %v472, %v308
        %v521 = vtanh.pop %v489
        %v522 = vtanh.pop %v490
        %v523 = vtanh.pop %v491
        %v524 = vtanh.pop %v492
        %v525 = vtanh.pop %v493
        %v526 = vtanh.pop %v494
        %v527 = vtanh.pop %v495
        %v528 = vtanh.pop %v496
        %v529 = vtanh.pop %v497
        %v530 = vtanh.pop %v498
        %v531 = vtanh.pop %v499
        %v532 = vtanh.pop %v500
        %v533 = vtanh.pop %v501
        %v534 = vtanh.pop %v502
        %v535 = vtanh.pop %v503
        %v536 = vtanh.pop %v504
        %v537 = vtanh.pop %v505
        %v538 = vtanh.pop %v506
        %v539 = vtanh.pop %v507
        %v540 = vtanh.pop %v508
        %v541 = vtanh.pop %v509
        %v542 = vtanh.pop %v510
        %v543 = vtanh.pop %v511
        %v544 = vtanh.pop %v512
        %v545 = vtanh.pop %v513
        %v546 = vtanh.pop %v514
        %v547 = vtanh.pop %v515
        %v548 = vtanh.pop %v516
        %v549 = vtanh.pop %v517
        %v550 = vtanh.pop %v518
        %v551 = vtanh.pop %v519
        %v552 = vtanh.pop %v520
        %v553 = vld [vmem:[#allocation7] sm:$0xff]
        %v554 = vld [vmem:[#allocation7 + $0x8] sm:$0xff]
        %v555 = vld [vmem:[#allocation7 + $0x10] sm:$0xff]
        %v556 = vld [vmem:[#allocation7 + $0x18] sm:$0xff]
        %v557 = vld [vmem:[#allocation7 + $0x20] sm:$0xff]
        %v558 = vld [vmem:[#allocation7 + $0x28] sm:$0xff]
        %v559 = vld [vmem:[#allocation7 + $0x30] sm:$0xff]
        %v560 = vld [vmem:[#allocation7 + $0x38] sm:$0xff]
        %v561 = vld [vmem:[#allocation7 + $0x40] sm:$0xff]
        %v562 = vld [vmem:[#allocation7 + $0x48] sm:$0xff]
        %v563 = vld [vmem:[#allocation7 + $0x50] sm:$0xff]
        %v564 = vld [vmem:[#allocation7 + $0x58] sm:$0xff]
        %v565 = vld [vmem:[#allocation7 + $0x60] sm:$0xff]
        %v566 = vld [vmem:[#allocation7 + $0x68] sm:$0xff]
        %v567 = vld [vmem:[#allocation7 + $0x70] sm:$0xff]
        %v568 = vld [vmem:[#allocation7 + $0x78] sm:$0xff]
        %v569 = vld [vmem:[%s3] sm:$0x1]
        %v571 = vlaneseq
        %v572 = vshrl.u32 %v571, 7
        %v573 = vsub.s32 0, %v572
        %v574 = vrot.slane %v569, %v573
        %576 = vmatprep.subr.mxu0 0.0
        %577 = vmatpush1.msra.mxu0 %v553
        %578 = vmatprep.subr.mxu0 0.0
        %579 = vmatpush1.msra.mxu0 %v554
        %580 = vmatprep.subr.mxu0 0.0
        %581 = vmatpush1.msra.mxu0 %v555
        %582 = vmatprep.subr.mxu0 0.0
        %583 = vmatpush1.msra.mxu0 %v556
        %584 = vmatprep.subr.mxu0 0.0
        %585 = vmatpush1.msra.mxu0 %v557
        %586 = vmatprep.subr.mxu0 0.0
        %587 = vmatpush1.msra.mxu0 %v558
        %588 = vmatprep.subr.mxu0 0.0
        %589 = vmatpush1.msra.mxu0 %v559
        %590 = vmatprep.subr.mxu0 0.0
        %591 = vmatpush1.msra.mxu0 %v560
        %592 = vmatprep.subr.mxu0 0.0
        %593 = vmatpush1.msra.mxu0 %v561
        %594 = vmatprep.subr.mxu0 0.0
        %595 = vmatpush1.msra.mxu0 %v562
        %596 = vmatprep.subr.mxu0 0.0
        %597 = vmatpush1.msra.mxu0 %v563
        %598 = vmatprep.subr.mxu0 0.0
        %599 = vmatpush1.msra.mxu0 %v564
        %600 = vmatprep.subr.mxu0 0.0
        %601 = vmatpush1.msra.mxu0 %v565
        %602 = vmatprep.subr.mxu0 0.0
        %603 = vmatpush1.msra.mxu0 %v566
        %604 = vmatprep.subr.mxu0 0.0
        %605 = vmatpush1.msra.mxu0 %v567
        %606 = vmatprep.subr.mxu0 0.0
        %607 = vmatpush1.msra.mxu0 %v568
        %608 = vmatprep.subr.mxu0 0.0
        %609 = vmatpush1.msra.mxu0 0.0
        %610 = vmatprep.subr.mxu0 0.0
        %611 = vmatpush1.msra.mxu0 0.0
        %612 = vmatprep.subr.mxu0 0.0
        %613 = vmatpush1.msra.mxu0 0.0
        %614 = vmatprep.subr.mxu0 0.0
        %615 = vmatpush1.msra.mxu0 0.0
        %616 = vmatprep.subr.mxu0 0.0
        %617 = vmatpush1.msra.mxu0 0.0
        %618 = vmatprep.subr.mxu0 0.0
        %619 = vmatpush1.msra.mxu0 0.0
        %620 = vmatprep.subr.mxu0 0.0
        %621 = vmatpush1.msra.mxu0 0.0
        %622 = vmatprep.subr.mxu0 0.0
        %623 = vmatpush1.msra.mxu0 0.0
        %624 = vmatprep.subr.mxu0 0.0
        %625 = vmatpush1.msra.mxu0 0.0
        %626 = vmatprep.subr.mxu0 0.0
        %627 = vmatpush1.msra.mxu0 0.0
        %628 = vmatprep.subr.mxu0 0.0
        %629 = vmatpush1.msra.mxu0 0.0
        %630 = vmatprep.subr.mxu0 0.0
        %631 = vmatpush1.msra.mxu0 0.0
        %632 = vmatprep.subr.mxu0 0.0
        %633 = vmatpush1.msra.mxu0 0.0
        %634 = vmatprep.subr.mxu0 0.0
        %635 = vmatpush1.msra.mxu0 0.0
        %636 = vmatprep.subr.mxu0 0.0
        %637 = vmatpush1.msra.mxu0 0.0
        %638 = vmatprep.subr.mxu0 0.0
        %639 = vmatpush1.msra.mxu0 0.0
        %640 = vmatprep.mubr.f32.mxu0 0.0
        %641 = vmatmul.mubr.f32.gmra.mrb[0].mxu0 %v521
        %v642 = vpop.f32.mrb[0].mxu0
        %v643 = vadd.f32 %v574, %v642
        %v644 = vpop.f32.mrb[0].mxu0
        %645 = vmatprep.mubr.f32.mxu0 0.0
        %646 = vmatmul.mubr.f32.gmra.mrb[0].mxu0 %v522
        %v647 = vpop.f32.mrb[0].mxu0
        %v648 = vadd.f32 %v574, %v647
        %v649 = vpop.f32.mrb[0].mxu0
        %650 = vmatprep.mubr.f32.mxu0 0.0
        %651 = vmatmul.mubr.f32.gmra.mrb[0].mxu0 %v523
        %v652 = vpop.f32.mrb[0].mxu0
        %v653 = vadd.f32 %v574, %v652
        %v654 = vpop.f32.mrb[0].mxu0
        %655 = vmatprep.mubr.f32.mxu0 0.0
        %656 = vmatmul.mubr.f32.gmra.mrb[0].mxu0 %v524
        %v657 = vpop.f32.mrb[0].mxu0
        %v658 = vadd.f32 %v574, %v657
        %v659 = vpop.f32.mrb[0].mxu0
        %660 = vmatprep.mubr.f32.mxu0 0.0
        %661 = vmatmul.mubr.f32.gmra.mrb[0].mxu0 %v525
        %v662 = vpop.f32.mrb[0].mxu0
        %v663 = vadd.f32 %v574, %v662
        %v664 = vpop.f32.mrb[0].mxu0
        %665 = vmatprep.mubr.f32.mxu0 0.0
        %666 = vmatmul.mubr.f32.gmra.mrb[0].mxu0 %v526
        %v667 = vpop.f32.mrb[0].mxu0
        %v668 = vadd.f32 %v574, %v667
        %v669 = vpop.f32.mrb[0].mxu0
        %670 = vmatprep.mubr.f32.mxu0 0.0
        %671 = vmatmul.mubr.f32.gmra.mrb[0].mxu0 %v527
        %v672 = vpop.f32.mrb[0].mxu0
        %v673 = vadd.f32 %v574, %v672
        %v674 = vpop.f32.mrb[0].mxu0
        %675 = vmatprep.mubr.f32.mxu0 0.0
        %676 = vmatmul.mubr.f32.gmra.mrb[0].mxu0 %v528
        %v677 = vpop.f32.mrb[0].mxu0
        %v678 = vadd.f32 %v574, %v677
        %v679 = vpop.f32.mrb[0].mxu0
        %680 = vmatprep.mubr.f32.mxu0 0.0
        %681 = vmatmul.mubr.f32.gmra.mrb[0].mxu0 %v529
        %v682 = vpop.f32.mrb[0].mxu0
        %v683 = vadd.f32 %v574, %v682
        %v684 = vpop.f32.mrb[0].mxu0
        %685 = vmatprep.mubr.f32.mxu0 0.0
        %686 = vmatmul.mubr.f32.gmra.mrb[0].mxu0 %v530
        %v687 = vpop.f32.mrb[0].mxu0
        %v688 = vadd.f32 %v574, %v687
        %v689 = vpop.f32.mrb[0].mxu0
        %690 = vmatprep.mubr.f32.mxu0 0.0
        %691 = vmatmul.mubr.f32.gmra.mrb[0].mxu0 %v531
        %v692 = vpop.f32.mrb[0].mxu0
        %v693 = vadd.f32 %v574, %v692
        %v694 = vpop.f32.mrb[0].mxu0
        %695 = vmatprep.mubr.f32.mxu0 0.0
        %696 = vmatmul.mubr.f32.gmra.mrb[0].mxu0 %v532
        %v697 = vpop.f32.mrb[0].mxu0
        %v698 = vadd.f32 %v574, %v697
        %v699 = vpop.f32.mrb[0].mxu0
        %700 = vmatprep.mubr.f32.mxu0 0.0
        %701 = vmatmul.mubr.f32.gmra.mrb[0].mxu0 %v533
        %v702 = vpop.f32.mrb[0].mxu0
        %v703 = vadd.f32 %v574, %v702
        %v704 = vpop.f32.mrb[0].mxu0
        %705 = vmatprep.mubr.f32.mxu0 0.0
        %706 = vmatmul.mubr.f32.gmra.mrb[0].mxu0 %v534
        %v707 = vpop.f32.mrb[0].mxu0
        %v708 = vadd.f32 %v574, %v707
        %v709 = vpop.f32.mrb[0].mxu0
        %710 = vmatprep.mubr.f32.mxu0 0.0
        %711 = vmatmul.mubr.f32.gmra.mrb[0].mxu0 %v535
        %v712 = vpop.f32.mrb[0].mxu0
        %v713 = vadd.f32 %v574, %v712
        %v714 = vpop.f32.mrb[0].mxu0
        %715 = vmatprep.mubr.f32.mxu0 0.0
        %716 = vmatmul.mubr.f32.gmra.mrb[0].mxu0 %v536
        %v717 = vpop.f32.mrb[0].mxu0
        %v718 = vadd.f32 %v574, %v717
        %v719 = vpop.f32.mrb[0].mxu0
        %720 = vmatprep.mubr.f32.mxu0 0.0
        %721 = vmatmul.mubr.f32.gmra.mrb[0].mxu0 %v537
        %v722 = vpop.f32.mrb[0].mxu0
        %v723 = vadd.f32 %v574, %v722
        %v724 = vpop.f32.mrb[0].mxu0
        %725 = vmatprep.mubr.f32.mxu0 0.0
        %726 = vmatmul.mubr.f32.gmra.mrb[0].mxu0 %v538
        %v727 = vpop.f32.mrb[0].mxu0
        %v728 = vadd.f32 %v574, %v727
        %v729 = vpop.f32.mrb[0].mxu0
        %730 = vmatprep.mubr.f32.mxu0 0.0
        %731 = vmatmul.mubr.f32.gmra.mrb[0].mxu0 %v539
        %v732 = vpop.f32.mrb[0].mxu0
        %v733 = vadd.f32 %v574, %v732
        %v734 = vpop.f32.mrb[0].mxu0
        %735 = vmatprep.mubr.f32.mxu0 0.0
        %736 = vmatmul.mubr.f32.gmra.mrb[0].mxu0 %v540
        %v737 = vpop.f32.mrb[0].mxu0
        %v738 = vadd.f32 %v574, %v737
        %v739 = vpop.f32.mrb[0].mxu0
        %740 = vmatprep.mubr.f32.mxu0 0.0
        %741 = vmatmul.mubr.f32.gmra.mrb[0].mxu0 %v541
        %v742 = vpop.f32.mrb[0].mxu0
        %v743 = vadd.f32 %v574, %v742
        %v744 = vpop.f32.mrb[0].mxu0
        %745 = vmatprep.mubr.f32.mxu0 0.0
        %746 = vmatmul.mubr.f32.gmra.mrb[0].mxu0 %v542
        %v747 = vpop.f32.mrb[0].mxu0
        %v748 = vadd.f32 %v574, %v747
        %v749 = vpop.f32.mrb[0].mxu0
        %750 = vmatprep.mubr.f32.mxu0 0.0
        %751 = vmatmul.mubr.f32.gmra.mrb[0].mxu0 %v543
        %v752 = vpop.f32.mrb[0].mxu0
        %v753 = vadd.f32 %v574, %v752
        %v754 = vpop.f32.mrb[0].mxu0
        %755 = vmatprep.mubr.f32.mxu0 0.0
        %756 = vmatmul.mubr.f32.gmra.mrb[0].mxu0 %v544
        %v757 = vpop.f32.mrb[0].mxu0
        %v758 = vadd.f32 %v574, %v757
        %v759 = vpop.f32.mrb[0].mxu0
        %760 = vmatprep.mubr.f32.mxu0 0.0
        %761 = vmatmul.mubr.f32.gmra.mrb[0].mxu0 %v545
        %v762 = vpop.f32.mrb[0].mxu0
        %v763 = vadd.f32 %v574, %v762
        %v764 = vpop.f32.mrb[0].mxu0
        %765 = vmatprep.mubr.f32.mxu0 0.0
        %766 = vmatmul.mubr.f32.gmra.mrb[0].mxu0 %v546
        %v767 = vpop.f32.mrb[0].mxu0
        %v768 = vadd.f32 %v574, %v767
        %v769 = vpop.f32.mrb[0].mxu0
        %770 = vmatprep.mubr.f32.mxu0 0.0
        %771 = vmatmul.mubr.f32.gmra.mrb[0].mxu0 %v547
        %v772 = vpop.f32.mrb[0].mxu0
        %v773 = vadd.f32 %v574, %v772
        %v774 = vpop.f32.mrb[0].mxu0
        %775 = vmatprep.mubr.f32.mxu0 0.0
        %776 = vmatmul.mubr.f32.gmra.mrb[0].mxu0 %v548
        %v777 = vpop.f32.mrb[0].mxu0
        %v778 = vadd.f32 %v574, %v777
        %v779 = vpop.f32.mrb[0].mxu0
        %780 = vmatprep.mubr.f32.mxu0 0.0
        %781 = vmatmul.mubr.f32.gmra.mrb[0].mxu0 %v549
        %v782 = vpop.f32.mrb[0].mxu0
        %v783 = vadd.f32 %v574, %v782
        %v784 = vpop.f32.mrb[0].mxu0
        %785 = vmatprep.mubr.f32.mxu0 0.0
        %786 = vmatmul.mubr.f32.gmra.mrb[0].mxu0 %v550
        %v787 = vpop.f32.mrb[0].mxu0
        %v788 = vadd.f32 %v574, %v787
        %v789 = vpop.f32.mrb[0].mxu0
        %790 = vmatprep.mubr.f32.mxu0 0.0
        %791 = vmatmul.mubr.f32.gmra.mrb[0].mxu0 %v551
        %v792 = vpop.f32.mrb[0].mxu0
        %v793 = vadd.f32 %v574, %v792
        %v794 = vpop.f32.mrb[0].mxu0
        %795 = vmatprep.mubr.f32.mxu0 0.0
        %796 = vmatmul.mubr.f32.gmra.mrb[0].mxu0 %v552
        %v797 = vpop.f32.mrb[0].mxu0
        %v798 = vadd.f32 %v574, %v797
        %v799 = vpop.f32.mrb[0].mxu0
        %800 = vdwg.mxu0
        %801 = vst [vmem:[%s300] sm:$0xff] %v643
        %802 = vst [vmem:[%s300 + $0x8] sm:$0xff] %v648
        %803 = vst [vmem:[%s300 + $0x10] sm:$0xff] %v653
        %804 = vst [vmem:[%s300 + $0x18] sm:$0xff] %v658
        %805 = vst [vmem:[%s300 + $0x20] sm:$0xff] %v663
        %806 = vst [vmem:[%s300 + $0x28] sm:$0xff] %v668
        %807 = vst [vmem:[%s300 + $0x30] sm:$0xff] %v673
        %808 = vst [vmem:[%s300 + $0x38] sm:$0xff] %v678
        %809 = vst [vmem:[%s300 + $0x40] sm:$0xff] %v683
        %810 = vst [vmem:[%s300 + $0x48] sm:$0xff] %v688
        %811 = vst [vmem:[%s300 + $0x50] sm:$0xff] %v693
        %812 = vst [vmem:[%s300 + $0x58] sm:$0xff] %v698
        %813 = vst [vmem:[%s300 + $0x60] sm:$0xff] %v703
        %814 = vst [vmem:[%s300 + $0x68] sm:$0xff] %v708
        %815 = vst [vmem:[%s300 + $0x70] sm:$0xff] %v713
        %816 = vst [vmem:[%s300 + $0x78] sm:$0xff] %v718
        %817 = vst [vmem:[%s300 + $0x80] sm:$0xff] %v723
        %818 = vst [vmem:[%s300 + $0x88] sm:$0xff] %v728
        %819 = vst [vmem:[%s300 + $0x90] sm:$0xff] %v733
        %820 = vst [vmem:[%s300 + $0x98] sm:$0xff] %v738
        %821 = vst [vmem:[%s300 + $0xa0] sm:$0xff] %v743
        %822 = vst [vmem:[%s300 + $0xa8] sm:$0xff] %v748
        %823 = vst [vmem:[%s300 + $0xb0] sm:$0xff] %v753
        %824 = vst [vmem:[%s300 + $0xb8] sm:$0xff] %v758
        %825 = vst [vmem:[%s300 + $0xc0] sm:$0xff] %v763
        %826 = vst [vmem:[%s300 + $0xc8] sm:$0xff] %v768
        %827 = vst [vmem:[%s300 + $0xd0] sm:$0xff] %v773
        %828 = vst [vmem:[%s300 + $0xd8] sm:$0xff] %v778
        %829 = vst [vmem:[%s300 + $0xe0] sm:$0xff] %v783
        %830 = vst [vmem:[%s300 + $0xe8] sm:$0xff] %v788
        %831 = vst [vmem:[%s300 + $0xf0] sm:$0xff] %v793
        %832 = vst [vmem:[%s300 + $0xf8] sm:$0xff] %v798
        %s833 = sand.u32 %s153, 1
        %s834 = scalar_lea.sflag [#allocation4], %s833
        %s835 = sand.u32 %s153, 1
        %s836 = smul.addr %s835, 256
        %s837 = scalar_lea.vmem [#allocation8], %s836
        // Predicated region
        $region49: #{tpu_custom_call.1} parent=35 // pred_check
          %p838 = pneg %p163
        $region50: #{tpu_custom_call.1} parent=35 // pred_check_branch
          %840 = sbr.rel (%p838) target = $region52
        $region51: #{tpu_custom_call.1} parent=35 // pred_region
          %s841 = smul.u32 16, %s30
          %s842 = smul.u32 2, %s31
          %s844 = ssub.s32 4096, 4096
          %845 = vsyncadd %s834, %s844
          %s846 = smul.addr %s841, 2
          %s847 = sadd.s32 %s842, %s846
          %s848 = smul.addr %s29, 32
          %s849 = sadd.s32 %s847, %s848
          %s850 = smul.addr %s849, 128
          %s851 = scalar_lea.hbm %s4, %s850
          %s852 = sshll.u32 %s837, 4
          %s853 = int_to_ptr.vmem [resolvable:$true] %s852
          %858 = dma.vmem_to_hbm [thread:$0]  %s853, 4096, %s851, %s834, 128, 128, 8
        $region52: #{tpu_custom_call.1} parent=35 // pred_fallthru
          _
      $region36: #{tpu_custom_call.1} parent=5 // pred_fallthru
        _
      %p859 = scmp.le.s32.totalorder 2, %s19
      // Predicated region
      $region53: #{tpu_custom_call.1} parent=5 // pred_check
        %p860 = pneg %p859
      $region54: #{tpu_custom_call.1} parent=5 // pred_check_branch
        %862 = sbr.rel (%p860) target = $region56
      $region55: #{tpu_custom_call.1} parent=5 // pred_region
        %s863 = ssub.s32 %s19, 2
        // Predicated region
        $region57: #{tpu_custom_call.1} parent=55 // pred_check
          %p864 = pneg %p169
        $region58: #{tpu_custom_call.1} parent=55 // pred_check_branch
          %866 = sbr.rel (%p864) target = $region60
        $region59: #{tpu_custom_call.1} parent=55 // pred_region
          %s867 = sand.u32 %s154, 1
          %s868 = scalar_lea.sflag [#allocation4], %s867
          %s869 = sand.u32 %s154, 1
          %s870 = smul.addr %s869, 256
          %s871 = scalar_lea.vmem [#allocation8], %s870
          %872 = dma.done %s868, 4096
        $region60: #{tpu_custom_call.1} parent=55 // pred_fallthru
          _
      $region56: #{tpu_custom_call.1} parent=5 // pred_fallthru
        _
    $region6: #{tpu_custom_call.1} parent=1 // loop_footer
      %s23 = sadd.s32 1, %s19
    $region7: #{tpu_custom_call.1} parent=1 // loop_footer_branch
      %18 = sbr.rel target = $region3
    $region8: #{tpu_custom_call.1} parent=1 // loop_exit
      _
    %873 = vsyncpa [#allocation3], 1
    %s874 = scalar_lea.sflag [#allocation3], 1
    %875 = vsyncpa %s874, 1
    %876 = vsyncpa [#allocation6], 1
    %s877 = scalar_lea.sflag [#allocation6], 1
    %878 = vsyncpa %s877, 1
    %879 = vsyncpa [#allocation4], 1
    %s880 = scalar_lea.sflag [#allocation4], 1
    %881 = vsyncpa %s880, 1

</llo_original>
